<compile_context>
chip_gen: v7x
topology: tpu7x:2x2x1
jax: 0.10.0
libtpu: 0.0.40
codegen_flags: <defaults>
</compile_context>

<pallas_src>
import functools

import numpy as np
import jax
import jax.numpy as jnp
from jax.experimental import pallas as pl
from jax.experimental.pallas import tpu as pltpu

SIGMA = 2.0
KW = int(SIGMA // 2) * 2 + 1           # 3
PAD = KW // 2                          # 1
_HALO_ROWS = 8                         # halo block height (sublane-aligned)


def _gaussian_kernel1d(kw: int, sigma: float) -> np.ndarray:
    # Matches torchvision.transforms.functional._get_gaussian_kernel1d
    half = (kw - 1) * 0.5
    x = np.linspace(-half, half, kw)
    pdf = np.exp(-0.5 * (x / sigma) ** 2)
    return (pdf / pdf.sum()).astype(np.float32)


K1D = _gaussian_kernel1d(KW, SIGMA)          # (3,)
K_EDGE = float(K1D[0])                       # == K1D[2] (symmetric)
K_CENTER = float(K1D[1])
K2D = np.outer(K1D, K1D).astype(np.float32)  # used only by the pure-JAX reference


# ---------------------------------------------------------------------------
# Kernel: separable 3x3 Gaussian blur on an interleaved (pblk, th, 2W) tile.
# Vertical reflect handled with halo rows (or within the tile when th == H);
# horizontal reflect handled with stride-2 XLU rolls + lane masks.
# ---------------------------------------------------------------------------
def _blur_kernel_impl(*refs, use_halo: bool):
    if use_halo:
        x_ref, above_ref, below_ref, o_ref = refs
    else:
        x_ref, o_ref = refs
        above_ref = below_ref = None

    pblk, th, LW = x_ref.shape

    # Hoisted boundary masks (small broadcastable arrays, no full-block iotas).
    row_ids = jax.lax.broadcasted_iota(jnp.int32, (1, th, 1), 1)
    is_row0 = row_ids == 0
    is_rowN = row_ids == th - 1
    col_ids = jax.lax.broadcasted_iota(jnp.int32, (1, 1, LW), 2)
    is_col_lo = col_ids < 2                 # first complex pixel (2 lanes)
    is_col_hi = col_ids >= LW - 2           # last complex pixel (2 lanes)

    x = x_ref[...]

    # ----- vertical (sublane) pass -----
    up = pltpu.roll(x, shift=1, axis=1)         # up[i] = x[i-1]  (circular)
    dn = pltpu.roll(x, shift=th - 1, axis=1)    # dn[i] = x[i+1]  (circular)
    if use_halo:
        r = pl.program_id(1)
        n_r = pl.num_programs(1)
        above = above_ref[:, _HALO_ROWS - 1:_HALO_ROWS, :]   # row just above tile
        below = below_ref[:, 0:1, :]                          # row just below tile
        # Global top/bottom rows use reflect (value already inside the tile).
        top = jnp.where(r == 0, dn, above)
        bot = jnp.where(r == n_r - 1, up, below)
    else:
        top = dn            # reflect: x[-1] -> x[1]
        bot = up            # reflect: x[H]  -> x[H-2]
    up = jnp.where(is_row0, top, up)
    dn = jnp.where(is_rowN, bot, dn)
    v = K_EDGE * (up + dn) + K_CENTER * x

    # ----- horizontal (lane) pass; stride 2 because re/im are interleaved -----
    lt = pltpu.roll(v, shift=2, axis=2)         # lt[c] = v[c-2]
    rt = pltpu.roll(v, shift=LW - 2, axis=2)    # rt[c] = v[c+2]
    lt = jnp.where(is_col_lo, rt, lt)           # reflect: pixel -1 -> pixel 1
    rt = jnp.where(is_col_hi, lt, rt)           # reflect: pixel W -> pixel W-2
    o_ref[...] = K_EDGE * (lt + rt) + K_CENTER * v


# ---------------------------------------------------------------------------
# Tiling / wrapper.
# ---------------------------------------------------------------------------
def _vmem_capacity_bytes() -> int:
    try:
        info = pltpu.get_tpu_info()
        cap = getattr(info, "vmem_capacity_bytes", None)
        if cap:
            return int(cap)
    except Exception:
        pass
    return 64 << 20   # conservative (v7x per-TensorCore VMEM)


def _choose_tiling(P: int, H: int, LW: int, vmem_cap: int,
                   block_budget_bytes=None):
    """Return (pblk, th, use_halo) for (P, H, LW) f32 planes."""
    bytes_per_row = LW * 4
    plane_bytes = H * bytes_per_row
    # 2 IO streams x 2 buffers + ~6-8x-block temporaries must stay well inside VMEM.
    budget = max(vmem_cap // 20, 1 << 20)
    if block_budget_bytes is not None:
        budget = int(block_budget_bytes)

    if plane_bytes <= budget:
        pblk = max(1, min(P, budget // max(plane_bytes, 1)))
        if P >= 2:
            # Guarantee >= 2 grid steps over planes (v7x second TC + pipelining).
            pblk = min(pblk, pl.cdiv(P, 2))
            return pblk, H, False
        if H % 16 == 0 and plane_bytes >= (1 << 20):
            # Single large plane: split rows so both TensorCores get work.
            return 1, H // 2, True
        return 1, H, False

    # Plane too large for one block: tile H with an 8-row-aligned tile dividing H.
    if H % 8 == 0:
        max_rows = max(_HALO_ROWS, (budget // bytes_per_row) // 8 * 8)
        th = _HALO_ROWS
        for cand in range(_HALO_ROWS, H, _HALO_ROWS):
            if H % cand == 0 and cand <= max_rows:
                th = cand
        return 1, th, True

    # TODO(synk): H not a multiple of 8 with a plane larger than the VMEM budget:
    # falls back to a whole-plane block (may exceed VMEM for pathological shapes).
    return 1, H, False


def _blur_planes_pallas(xf: jax.Array, block_budget_bytes=None) -> jax.Array:
    """xf: (P, H, 2W) float32 interleaved re/im -> blurred, same shape/dtype."""
    P, H, LW = xf.shape
    vmem_cap = _vmem_capacity_bytes()
    pblk, th, use_halo = _choose_tiling(P, H, LW, vmem_cap, block_budget_bytes)

    grid = (pl.cdiv(P, pblk), H // th)
    main_spec = pl.BlockSpec((pblk, th, LW), lambda p, r: (p, r, 0))

    blk_bytes = pblk * th * LW * 4
    halo_bytes = pblk * _HALO_ROWS * LW * 4 if use_halo else 0
    est = (2 * 2 * blk_bytes          # in + out streams, double buffered
           + 2 * 2 * halo_bytes       # two halo-row streams, double buffered
           + 8 * blk_bytes            # in-kernel temporaries headroom
           + (2 << 20))
    vmem_limit = int(min(max(est, 32 << 20),
                         max(vmem_cap - (8 << 20), 32 << 20)))

    if use_halo:
        hdiv = th // _HALO_ROWS
        n_hblk = H // _HALO_ROWS
        above_spec = pl.BlockSpec(
            (pblk, _HALO_ROWS, LW),
            lambda p, r: (p, jnp.maximum(r * hdiv - 1, 0), 0))
        below_spec = pl.BlockSpec(
            (pblk, _HALO_ROWS, LW),
            lambda p, r: (p, jnp.minimum((r + 1) * hdiv, n_hblk - 1), 0))
        in_specs = [main_spec, above_spec, below_spec]
        args = (xf, xf, xf)
    else:
        in_specs = [main_spec]
        args = (xf,)

    kernel = functools.partial(_blur_kernel_impl, use_halo=use_halo)
    return pl.pallas_call(
        kernel,
        out_shape=jax.ShapeDtypeStruct((P, H, LW), jnp.float32),
        grid=grid,
        in_specs=in_specs,
        out_specs=main_spec,
        compiler_params=pltpu.CompilerParams(
            dimension_semantics=("parallel", "parallel"),
            vmem_limit_bytes=vmem_limit),
    )(*args)


def _complex_to_interleaved_f32(x: jax.Array) -> jax.Array:
    """(..., W) complex -> (..., 2W) float32 with [re, im] interleaved."""
    x = x.astype(jnp.complex64)
    try:
        y = jax.lax.bitcast_convert_type(x, jnp.float32)     # (..., W, 2), zero-copy
    except Exception:
        # TODO(synk): XLA rejects complex<->real bitcast; one fused interleave
        # pass (single HBM read+write) remains instead of a zero-copy view.
        y = jnp.stack([jnp.real(x), jnp.imag(x)], axis=-1).astype(jnp.float32)
    return y.reshape(*x.shape[:-1], 2 * x.shape[-1])


def _interleaved_f32_to_complex(y: jax.Array) -> jax.Array:
    """(..., W, 2) float32 -> (..., W) complex64."""
    try:
        return jax.lax.bitcast_convert_type(y, jnp.complex64)
    except Exception:
        return jax.lax.complex(y[..., 0], y[..., 1])


def gaussian_blur_forward(field: jax.Array, block_budget_bytes=None) -> jax.Array:
    """Pallas equivalent of Gaussian_Blur.forward.

    field: complex array, either (M, N) or (B, C, H, W).
    Returns a complex64 array (blurred real + 1j * blurred imag), squeezed like
    the PyTorch module.
    """
    two_d = (field.ndim == 2)
    x = field[None, None, :, :] if two_d else field
    B, C, H, W = x.shape
    assert H >= 2 and W >= 2, "reflect padding with pad=1 requires H, W >= 2"
    P = B * C

    xf = _complex_to_interleaved_f32(x).reshape(P, H, 2 * W)
    out_f = _blur_planes_pallas(xf, block_budget_bytes)           # (P, H, 2W) f32
    out_c = _interleaved_f32_to_complex(out_f.reshape(B, C, H, W, 2))
    # The PyTorch module squeezes singleton dims in both branches.
    return jnp.squeeze(out_c)


# ---------------------------------------------------------------------------
# Pure-JAX reference (reflect pad + 3x3 outer-product gaussian, per channel).
# ---------------------------------------------------------------------------
def _reference_blur(field: jax.Array) -> jax.Array:
    two_d = (field.ndim == 2)
    x = field[None, None, :, :] if two_d else field
    B, C, H, W = x.shape

    def blur_real(p):   # p: (P, H, W) float32
        pad = jnp.pad(p, ((0, 0), (PAD, PAD), (PAD, PAD)), mode="reflect")
        acc = jnp.zeros_like(p)
        for i in range(KW):
            for j in range(KW):
                acc = acc + float(K2D[i, j]) * pad[:, i:i + H, j:j + W]
        return acc

    re = blur_real(jnp.real(x).astype(jnp.float32).reshape(B * C, H, W))
    im = blur_real(jnp.imag(x).astype(jnp.float32).reshape(B * C, H, W))
    out = (re + 1j * im).astype(jnp.complex64).reshape(B, C, H, W)
    return jnp.squeeze(out)


if __name__ == "__main__":
    key = jax.random.PRNGKey(0)
    k1, k2, k3, k4 = jax.random.split(key, 4)

    # NCHW complex input, consistent with the conv-style forward.
    B, C, H, W = 2, 4, 16, 16
    field = (jax.random.normal(k1, (B, C, H, W), dtype=jnp.float32)
             + 1j * jax.random.normal(k2, (B, C, H, W), dtype=jnp.float32)
             ).astype(jnp.complex64)

    out = jax.block_until_ready(gaussian_blur_forward(field))
    ref = jax.block_until_ready(_reference_blur(field))
    assert out.shape == ref.shape, (out.shape, ref.shape)
    assert jnp.allclose(out, ref, atol=1e-5, rtol=1e-5), "mismatch vs reference"

    # Also exercise the 2D (M, N) branch of the module.
    field2d = field[0, 0]
    out2d = jax.block_until_ready(gaussian_blur_forward(field2d))
    ref2d = jax.block_until_ready(_reference_blur(field2d))
    assert out2d.shape == (H, W)
    assert jnp.allclose(out2d, ref2d, atol=1e-5, rtol=1e-5), "2D branch mismatch"

    # Exercise the H-halo-tiled (large-plane / v7x) code path on a small input
    # by forcing a tiny per-block budget.
    B2, C2, H2, W2 = 1, 2, 32, 16
    field_t = (jax.random.normal(k3, (B2, C2, H2, W2), dtype=jnp.float32)
               + 1j * jax.random.normal(k4, (B2, C2, H2, W2), dtype=jnp.float32)
               ).astype(jnp.complex64)
    out_t = jax.block_until_ready(
        gaussian_blur_forward(field_t, block_budget_bytes=2048))
    ref_t = jax.block_until_ready(_reference_blur(field_t))
    assert out_t.shape == ref_t.shape
    assert jnp.allclose(out_t, ref_t, atol=1e-5, rtol=1e-5), "halo-tiled mismatch"

    print("KERNEL_OK")
</pallas_src>

<mosaic_0001>
module attributes {stable_mosaic.version = 11 : i64} {
  func.func @_blur_kernel_impl(%arg0: i32, %arg1: i32, %arg2: memref<4x16x32xf32, #tpu.memory_space<vmem>>, %arg3: memref<4x16x32xf32, #tpu.memory_space<vmem>>) attributes {dimension_semantics = [#tpu.dimension_semantics<parallel>, #tpu.dimension_semantics<parallel>], iteration_bounds = array<i64: 2, 1>, scalar_prefetch = 0 : i64, scratch_operands = 0 : i64, tpu.core_type = #tpu.core_type<tc>, window_params = [{transform_indices = @transform_0, window_bounds = array<i64: 4, 16, 32>}, {transform_indices = @transform_1, window_bounds = array<i64: 4, 16, 32>}]} {
    %0 = tpu.iota {dimensions = array<i32: 1>} : vector<1x16x1xi32>
    %c0_i32 = arith.constant 0 : i32
    %1 = vector.broadcast %c0_i32 : i32 to vector<1x16x1xi32>
    %2 = arith.cmpi eq, %0, %1 : vector<1x16x1xi32>
    %c15_i32 = arith.constant 15 : i32
    %3 = vector.broadcast %c15_i32 : i32 to vector<1x16x1xi32>
    %4 = arith.cmpi eq, %0, %3 : vector<1x16x1xi32>
    %5 = tpu.iota {dimensions = array<i32: 2>} : vector<1x1x32xi32>
    %c2_i32 = arith.constant 2 : i32
    %6 = vector.broadcast %c2_i32 : i32 to vector<1x1x32xi32>
    %7 = arith.cmpi slt, %5, %6 : vector<1x1x32xi32>
    %c30_i32 = arith.constant 30 : i32
    %8 = vector.broadcast %c30_i32 : i32 to vector<1x1x32xi32>
    %9 = arith.cmpi sge, %5, %8 : vector<1x1x32xi32>
    %c0 = arith.constant 0 : index
    %c0_0 = arith.constant 0 : index
    %c0_1 = arith.constant 0 : index
    %10 = vector.load %arg2[%c0, %c0_0, %c0_1] : memref<4x16x32xf32, #tpu.memory_space<vmem>>, vector<4x16x32xf32>
    %c1_i32 = arith.constant 1 : i32
    %11 = tpu.dynamic_rotate %10 by %c1_i32 dim 1 : vector<4x16x32xf32>, i32 -> vector<4x16x32xf32>
    %c15_i32_2 = arith.constant 15 : i32
    %12 = tpu.dynamic_rotate %10 by %c15_i32_2 dim 1 : vector<4x16x32xf32>, i32 -> vector<4x16x32xf32>
    %13 = vector.shape_cast %2 : vector<1x16x1xi1> to vector<1x16x1xi1>
    %14 = vector.broadcast %13 : vector<1x16x1xi1> to vector<4x16x32xi1>
    %15 = arith.select %14, %12, %11 : vector<4x16x32xi1>, vector<4x16x32xf32>
    %16 = vector.shape_cast %4 : vector<1x16x1xi1> to vector<1x16x1xi1>
    %17 = vector.broadcast %16 : vector<1x16x1xi1> to vector<4x16x32xi1>
    %18 = arith.select %17, %11, %12 : vector<4x16x32xi1>, vector<4x16x32xf32>
    %19 = arith.addf %15, %18 : vector<4x16x32xf32>
    %cst = arith.constant 0.319167763 : f32
    %20 = vector.broadcast %cst : f32 to vector<4x16x32xf32>
    %21 = arith.mulf %20, %19 : vector<4x16x32xf32>
    %cst_3 = arith.constant 0.361664474 : f32
    %22 = vector.broadcast %cst_3 : f32 to vector<4x16x32xf32>
    %23 = arith.mulf %22, %10 : vector<4x16x32xf32>
    %24 = arith.addf %21, %23 : vector<4x16x32xf32>
    %c2_i32_4 = arith.constant 2 : i32
    %25 = tpu.dynamic_rotate %24 by %c2_i32_4 dim 2 : vector<4x16x32xf32>, i32 -> vector<4x16x32xf32>
    %c30_i32_5 = arith.constant 30 : i32
    %26 = tpu.dynamic_rotate %24 by %c30_i32_5 dim 2 : vector<4x16x32xf32>, i32 -> vector<4x16x32xf32>
    %27 = vector.shape_cast %7 : vector<1x1x32xi1> to vector<1x1x32xi1>
    %28 = vector.broadcast %27 : vector<1x1x32xi1> to vector<4x16x32xi1>
    %29 = arith.select %28, %26, %25 : vector<4x16x32xi1>, vector<4x16x32xf32>
    %30 = vector.shape_cast %9 : vector<1x1x32xi1> to vector<1x1x32xi1>
    %31 = vector.broadcast %30 : vector<1x1x32xi1> to vector<4x16x32xi1>
    %32 = arith.select %31, %29, %26 : vector<4x16x32xi1>, vector<4x16x32xf32>
    %33 = arith.addf %29, %32 : vector<4x16x32xf32>
    %cst_6 = arith.constant 0.319167763 : f32
    %34 = vector.broadcast %cst_6 : f32 to vector<4x16x32xf32>
    %35 = arith.mulf %34, %33 : vector<4x16x32xf32>
    %cst_7 = arith.constant 0.361664474 : f32
    %36 = vector.broadcast %cst_7 : f32 to vector<4x16x32xf32>
    %37 = arith.mulf %36, %24 : vector<4x16x32xf32>
    %38 = arith.addf %35, %37 : vector<4x16x32xf32>
    %c0_8 = arith.constant 0 : index
    %c0_9 = arith.constant 0 : index
    %c0_10 = arith.constant 0 : index
    %39 = vector.load %arg3[%c0_8, %c0_9, %c0_10] : memref<4x16x32xf32, #tpu.memory_space<vmem>>, vector<4x16x32xf32>
    tpu.vector_store %arg3[%c0_8, %c0_9, %c0_10], %38 {strides = array<i32>} : memref<4x16x32xf32, #tpu.memory_space<vmem>>, vector<4x16x32xf32>,
    return
  }
  func.func @transform_0(%arg0: i32, %arg1: i32) -> (i32, i32, i32) {
    %c0_i32 = arith.constant 0 : i32
    %c0_i32_0 = arith.constant 0 : i32
    return %arg0, %arg1, %c0_i32 : i32, i32, i32
  }
  func.func @transform_1(%arg0: i32, %arg1: i32) -> (i32, i32, i32) {
    %c0_i32 = arith.constant 0 : i32
    %c0_i32_0 = arith.constant 0 : i32
    return %arg0, %arg1, %c0_i32 : i32, i32, i32
  }
}

</mosaic_0001>

<llo_original>
// kernel: tpu_custom_call.1
$region0: #{tpu_custom_call.1}
  #allocation0 [shape = 'u32[]', space=smem, size = 0x4, offset = 0x4, fixed_abs, tag = 'smem constant byte address 0x4 - core index']
  #allocation1 [shape = 'u32[144,128]{1,0:T(1,128)}', space=vmem, size = 0x12000, scoped, tag = 'internal scratch']
  %s0 = inlined_call_operand.hbm [shape: f32[8,16,32], index: 0, kind: input, shape index: {}]
  %s1 = inlined_call_operand.hbm [shape: f32[8,16,32], index: 1, kind: output, shape index: {}]
  %s2 = sld [smem:[#allocation0]]
  $region41: #{tpu_custom_call.1} parent=0
    _
  %s4 = ssub.s32 1, %s2
  %s5 = scalar_select 0, %s4, %s2
  $region1: #{tpu_custom_call.1} parent=0
    #allocation2 [shape = 'u8[65536]{0}', space=vmem, size = 0x10000, scoped, tag = 'input window, operand 0']
    #allocation3 [shape = 's32[2]{0}', space=sflag, size = 0x8, scoped, tag = 'scoped memory for tpu_custom_call.1']
    #allocation4 [shape = 's32[2]{0}', space=sflag, size = 0x8, scoped, tag = 'scoped memory for tpu_custom_call.1']
    #allocation5 [shape = 'u8[65536]{0}', space=vmem, size = 0x10000, scoped, tag = 'output window, operand 0']
    %6 = vsyncpa [#allocation3], 0
    %s7 = scalar_lea.sflag [#allocation3], 1
    %8 = vsyncpa %s7, 0
    %9 = vsyncpa [#allocation4], 0
    %s10 = scalar_lea.sflag [#allocation4], 1
    %11 = vsyncpa %s10, 0
    loop: start=0, step=1, limit=4
    $region2: #{tpu_custom_call.1} parent=1 // loop_pre_header
      _
    $region3: #{tpu_custom_call.1} parent=1 // loop_header
      %s13 = sphi 0, %s17
      %p14 = scmp.ge.s32.totalorder %s13, 4
      %s20 = sphi 0, %s32
      %s21 = sphi 0, %s28
      %s22 = sphi 0, %s20
      %s23 = sphi 0, %s21
      %s24 = sphi 0, %s22
      %s25 = sphi 0, %s23
      %s37 = sphi 0, %s39
      %s40 = sphi 0, %s37
      %s41 = sphi 0, %s40
      %s57 = sphi 0, %s41
      %s65 = sphi 0, %s67
      %s68 = sphi 0, %s65
      %s69 = sphi 0, %s68
      %s85 = sphi 0, %s69
    $region4: #{tpu_custom_call.1} parent=1 // loop_header_branch
      %16 = sbr.rel (%p14) target = $region8
    $region5: #{tpu_custom_call.1} parent=1 // loop_body
      %s18 = ssub.s32 %s13, 1
      %s19 = ssub.s32 %s13, 2
      %s26 = sadd.s32 1, %s21
      %p27 = scmp.ge.s32.totalorder %s26, 1
      %s28 = scalar_select %p27, 0, %s26
      %s29 = sadd.s32 1, %s20
      %s30 = scalar_select %p27, %s29, %s20
      %p31 = scmp.ge.s32.totalorder %s30, 2
      %s32 = scalar_select %p31, 0, %s30
      %s33 = ssub.s32 %s20, %s32
      %s34 = ssub.s32 %s21, %s28
      %s35 = sor.u32 %s33, %s34
      %p36 = scmp.eq.s32.totalorder %s35, 0
      %s38 = sadd.s32 %s37, 1
      %s39 = scalar_select %p36, %s37, %s38
      %p42 = pneg %p36
      %p43 = scmp.eq.s32.totalorder %s13, 1
      %p44 = por %p42, %p43
      %p45 = scmp.ne.s32.totalorder %s37, %s40
      %p46 = scmp.eq.s32.totalorder %s13, 0
      %p47 = por %p45, %p46
      %p48 = scmp.ne.s32.totalorder %s37, %s40
      %p49 = scmp.eq.s32.totalorder %s18, 1
      %p50 = por %p48, %p49
      %p51 = scmp.ne.s32.totalorder %s40, %s41
      %p52 = scmp.eq.s32.totalorder %s18, 0
      %p53 = por %p51, %p52
      %p54 = scmp.ne.s32.totalorder %s40, %s41
      %p55 = scmp.eq.s32.totalorder %s19, 1
      %p56 = por %p54, %p55
      %p58 = scmp.ne.s32.totalorder %s41, %s57
      %p59 = scmp.eq.s32.totalorder %s19, 0
      %p60 = por %p58, %p59
      %s61 = ssub.s32 %s20, %s32
      %s62 = ssub.s32 %s21, %s28
      %s63 = sor.u32 %s61, %s62
      %p64 = scmp.eq.s32.totalorder %s63, 0
      %s66 = sadd.s32 %s65, 1
      %s67 = scalar_select %p64, %s65, %s66
      %p70 = pneg %p64
      %p71 = scmp.eq.s32.totalorder %s13, 1
      %p72 = por %p70, %p71
      %p73 = scmp.ne.s32.totalorder %s65, %s68
      %p74 = scmp.eq.s32.totalorder %s13, 0
      %p75 = por %p73, %p74
      %p76 = scmp.ne.s32.totalorder %s65, %s68
      %p77 = scmp.eq.s32.totalorder %s18, 1
      %p78 = por %p76, %p77
      %p79 = scmp.ne.s32.totalorder %s68, %s69
      %p80 = scmp.eq.s32.totalorder %s18, 0
      %p81 = por %p79, %p80
      %p82 = scmp.ne.s32.totalorder %s68, %s69
      %p83 = scmp.eq.s32.totalorder %s19, 1
      %p84 = por %p82, %p83
      %p86 = scmp.ne.s32.totalorder %s69, %s85
      %p87 = scmp.eq.s32.totalorder %s19, 0
      %p88 = por %p86, %p87
      %p89 = scmp.le.s32.totalorder 1, %s13
      %p90 = scmp.lt.s32.totalorder %s13, 3
      %p91 = pnand %p89, %p90
      %p92 = pneg %p91
      // Predicated region
      $region9: #{tpu_custom_call.1} parent=5 // pred_check
        _
      $region10: #{tpu_custom_call.1} parent=5 // pred_check_branch
        %94 = sbr.rel (%p91) target = $region12
      $region11: #{tpu_custom_call.1} parent=5 // pred_region
        %s95 = ssub.s32 %s13, 1
      $region12: #{tpu_custom_call.1} parent=5 // pred_fallthru
        _
      %p96 = scmp.lt.s32.totalorder %s13, 2
      // Predicated region
      $region13: #{tpu_custom_call.1} parent=5 // pred_check
        %p97 = pneg %p96
      $region14: #{tpu_custom_call.1} parent=5 // pred_check_branch
        %99 = sbr.rel (%p97) target = $region16
      $region15: #{tpu_custom_call.1} parent=5 // pred_region
        // Predicated region
        $region17: #{tpu_custom_call.1} parent=15 // pred_check
          %p100 = pneg %p47
        $region18: #{tpu_custom_call.1} parent=15 // pred_check_branch
          %102 = sbr.rel (%p100) target = $region20
        $region19: #{tpu_custom_call.1} parent=15 // pred_region
          %s103 = sand.u32 %s37, 1
          %s104 = scalar_lea.sflag [#allocation3], %s103
          %s105 = sand.u32 %s37, 1
          %s106 = smul.addr %s105, 64
          %s107 = scalar_lea.vmem [#allocation2], %s106
          %s108 = smul.u32 4, %s20
          %s109 = smul.u32 2, %s21
          %s111 = ssub.s32 1024, 1024
          %112 = vsyncadd %s104, %s111
          %s113 = smul.addr %s108, 2
          %s114 = sadd.s32 %s109, %s113
          %s115 = smul.addr %s114, 128
          %s116 = scalar_lea.hbm %s0, %s115
          %s117 = sshll.u32 %s107, 4
          %s118 = int_to_ptr.vmem [resolvable:$true] %s117
          %123 = dma.hbm_to_vmem [thread:$0]  %s116, 1024, %s118, %s104, 128, 128, 8
        $region20: #{tpu_custom_call.1} parent=15 // pred_fallthru
          _
      $region16: #{tpu_custom_call.1} parent=5 // pred_fallthru
        _
      %p124 = scmp.le.s32.totalorder 1, %s13
      %p125 = scmp.lt.s32.totalorder %s13, 3
      %p126 = pnand %p124, %p125
      %p127 = pneg %p126
      // Predicated region
      $region21: #{tpu_custom_call.1} parent=5 // pred_check
        _
      $region22: #{tpu_custom_call.1} parent=5 // pred_check_branch
        %129 = sbr.rel (%p126) target = $region24
      $region23: #{tpu_custom_call.1} parent=5 // pred_region
        %s130 = ssub.s32 %s13, 1
        %s131 = sand.u32 %s40, 1
        %s132 = scalar_lea.sflag [#allocation3], %s131
        %s133 = sand.u32 %s40, 1
        %s134 = smul.addr %s133, 64
        %s135 = scalar_lea.vmem [#allocation2], %s134
        // Predicated region
        $region25: #{tpu_custom_call.1} parent=23 // pred_check
          %p136 = pneg %p53
        $region26: #{tpu_custom_call.1} parent=23 // pred_check_branch
          %138 = sbr.rel (%p136) target = $region28
        $region27: #{tpu_custom_call.1} parent=23 // pred_region
          %139 = dma.done %s132, 1024
        $region28: #{tpu_custom_call.1} parent=23 // pred_fallthru
          _
        %s140 = sand.u32 %s40, 1
        %s141 = scalar_lea.sflag [#allocation3], %s140
        %s142 = sand.u32 %s40, 1
        %s143 = smul.addr %s142, 64
        %s144 = scalar_lea.vmem [#allocation2], %s143
        %p145 = pneg %p53
        %p146 = pneg %p50
        %p147 = pneg %p81
        %p148 = pneg %p78
        %s149 = sand.u32 %s68, 1
        %s150 = scalar_lea.sflag [#allocation4], %s149
        %s151 = sand.u32 %s68, 1
        %s152 = smul.addr %s151, 64
        %s153 = scalar_lea.vmem [#allocation5], %s152
        %s154 = smul.u32 4, %s22
        %s155 = smul.u32 2, %s23
        %s156 = smul.u32 4, %s22
        %s157 = smul.u32 2, %s23
        %v158 = vlaneseq
        %v159 = vshrl.u32 %v158, 7
        %v160 = vadd.s32 %v159, 8
        %vm161 = vcmp.eq.s32.totalorder %v159, 0
        %vm162 = vcmp.eq.s32.totalorder %v160, 0
        %vm163 = vcmp.eq.s32.totalorder %v159, 15
        %vm164 = vcmp.eq.s32.totalorder %v160, 15
        %v165 = vlaneseq
        %v166 = vand.u32 %v165, 127
        %vm167 = vcmp.lt.s32.totalorder %v166, 2
        %vm168 = vcmp.ge.s32.totalorder %v166, 30
        %v169 = vld [vmem:[%s135] sm:$0xff]
        %v170 = vld [vmem:[%s135 + $0x8] sm:$0xff]
        %v171 = vld [vmem:[%s135 + $0x10] sm:$0xff]
        %v172 = vld [vmem:[%s135 + $0x18] sm:$0xff]
        %v173 = vld [vmem:[%s135 + $0x20] sm:$0xff]
        %v174 = vld [vmem:[%s135 + $0x28] sm:$0xff]
        %v175 = vld [vmem:[%s135 + $0x30] sm:$0xff]
        %v176 = vld [vmem:[%s135 + $0x38] sm:$0xff]
        %v177 = vrot.slane %v169, 7
        %v178 = vrot.slane %v171, 7
        %v179 = vrot.slane %v173, 7
        %v180 = vrot.slane %v175, 7
        %v181 = vrot.slane %v170, 7
        %v182 = vrot.slane %v172, 7
        %v183 = vrot.slane %v174, 7
        %v184 = vrot.slane %v176, 7
        %vm185 = vcmp.lt.s32.totalorder %v159, 1
        %v186 = vsel %vm185, %v177, %v181
        %v187 = vsel %vm185, %v178, %v182
        %v188 = vsel %vm185, %v179, %v183
        %v189 = vsel %vm185, %v180, %v184
        %v190 = vsel %vm185, %v181, %v177
        %v191 = vsel %vm185, %v182, %v178
        %v192 = vsel %vm185, %v183, %v179
        %v193 = vsel %vm185, %v184, %v180
        %v194 = vrot.slane %v169, 1
        %v195 = vrot.slane %v171, 1
        %v196 = vrot.slane %v173, 1
        %v197 = vrot.slane %v175, 1
        %v198 = vrot.slane %v170, 1
        %v199 = vrot.slane %v172, 1
        %v200 = vrot.slane %v174, 1
        %v201 = vrot.slane %v176, 1
        %vm202 = vcmp.lt.s32.totalorder %v159, 7
        %v203 = vsel %vm202, %v194, %v198
        %v204 = vsel %vm202, %v195, %v199
        %v205 = vsel %vm202, %v196, %v200
        %v206 = vsel %vm202, %v197, %v201
        %v207 = vsel %vm202, %v198, %v194
        %v208 = vsel %vm202, %v199, %v195
        %v209 = vsel %vm202, %v200, %v196
        %v210 = vsel %vm202, %v201, %v197
        %v211 = vsel %vm161, 1, 0
        %v212 = vsel %vm162, 1, 0
        %vm213 = vcmp.eq.s32.totalorder %v211, 1
        %vm214 = vcmp.eq.s32.totalorder %v212, 1
        %v215 = vsel %vm213, %v203, %v190
        %v216 = vsel %vm214, %v207, %v186
        %v217 = vsel %vm213, %v204, %v191
        %v218 = vsel %vm214, %v208, %v187
        %v219 = vsel %vm213, %v205, %v192
        %v220 = vsel %vm214, %v209, %v188
        %v221 = vsel %vm213, %v206, %v193
        %v222 = vsel %vm214, %v210, %v189
        %v223 = vsel %vm163, 1, 0
        %v224 = vsel %vm164, 1, 0
        %vm225 = vcmp.eq.s32.totalorder %v223, 1
        %vm226 = vcmp.eq.s32.totalorder %v224, 1
        %v227 = vsel %vm225, %v190, %v203
        %v228 = vsel %vm226, %v186, %v207
        %v229 = vsel %vm225, %v191, %v204
        %v230 = vsel %vm226, %v187, %v208
        %v231 = vsel %vm225, %v192, %v205
        %v232 = vsel %vm226, %v188, %v209
        %v233 = vsel %vm225, %v193, %v206
        %v234 = vsel %vm226, %v189, %v210
        %v235 = vadd.f32 %v215, %v227
        %v236 = vadd.f32 %v216, %v228
        %v237 = vadd.f32 %v217, %v229
        %v238 = vadd.f32 %v218, %v230
        %v239 = vadd.f32 %v219, %v231
        %v240 = vadd.f32 %v220, %v232
        %v241 = vadd.f32 %v221, %v233
        %v242 = vadd.f32 %v222, %v234
        %v243 = vmul.f32 %v235, 0.31916776
        %v244 = vmul.f32 %v236, 0.31916776
        %v245 = vmul.f32 %v237, 0.31916776
        %v246 = vmul.f32 %v238, 0.31916776
        %v247 = vmul.f32 %v239, 0.31916776
        %v248 = vmul.f32 %v240, 0.31916776
        %v249 = vmul.f32 %v241, 0.31916776
        %v250 = vmul.f32 %v242, 0.31916776
        %v251 = vmul.f32 %v169, 0.36166447
        %v252 = vmul.f32 %v170, 0.36166447
        %v253 = vmul.f32 %v171, 0.36166447
        %v254 = vmul.f32 %v172, 0.36166447
        %v255 = vmul.f32 %v173, 0.36166447
        %v256 = vmul.f32 %v174, 0.36166447
        %v257 = vmul.f32 %v175, 0.36166447
        %v258 = vmul.f32 %v176, 0.36166447
        %v259 = vadd.f32 %v243, %v251
        %v260 = vadd.f32 %v244, %v252
        %v261 = vadd.f32 %v245, %v253
        %v262 = vadd.f32 %v246, %v254
        %v263 = vadd.f32 %v247, %v255
        %v264 = vadd.f32 %v248, %v256
        %v265 = vadd.f32 %v249, %v257
        %v266 = vadd.f32 %v250, %v258
        %vm267 = vcmask 1047808
        %268 = vrot.lane.b32.xlu0 %v259, 32
        %v269 = vpop.permute.xlu0 %268
        %v270 = vsel %vm267, %v269, %v259
        %271 = vrot.lane.b32.xlu0 %v260, 32
        %v272 = vpop.permute.xlu0 %271
        %v273 = vsel %vm267, %v272, %v260
        %274 = vrot.lane.b32.xlu0 %v261, 32
        %v275 = vpop.permute.xlu0 %274
        %v276 = vsel %vm267, %v275, %v261
        %277 = vrot.lane.b32.xlu0 %v262, 32
        %v278 = vpop.permute.xlu0 %277
        %v279 = vsel %vm267, %v278, %v262
        %280 = vrot.lane.b32.xlu0 %v263, 32
        %v281 = vpop.permute.xlu0 %280
        %v282 = vsel %vm267, %v281, %v263
        %283 = vrot.lane.b32.xlu0 %v264, 32
        %v284 = vpop.permute.xlu0 %283
        %v285 = vsel %vm267, %v284, %v264
        %286 = vrot.lane.b32.xlu0 %v265, 32
        %v287 = vpop.permute.xlu0 %286
        %v288 = vsel %vm267, %v287, %v265
        %289 = vrot.lane.b32.xlu0 %v266, 32
        %v290 = vpop.permute.xlu0 %289
        %v291 = vsel %vm267, %v290, %v266
        %292 = vrot.lane.b32.xlu0 %v270, 32
        %v293 = vpop.permute.xlu0 %292
        %294 = vrot.lane.b32.xlu0 %v273, 32
        %v295 = vpop.permute.xlu0 %294
        %296 = vrot.lane.b32.xlu0 %v276, 32
        %v297 = vpop.permute.xlu0 %296
        %298 = vrot.lane.b32.xlu0 %v279, 32
        %v299 = vpop.permute.xlu0 %298
        %300 = vrot.lane.b32.xlu0 %v282, 32
        %v301 = vpop.permute.xlu0 %300
        %302 = vrot.lane.b32.xlu0 %v285, 32
        %v303 = vpop.permute.xlu0 %302
        %304 = vrot.lane.b32.xlu0 %v288, 32
        %v305 = vpop.permute.xlu0 %304
        %306 = vrot.lane.b32.xlu0 %v291, 32
        %v307 = vpop.permute.xlu0 %306
        %v308 = vsel %vm267, %v293, %v259
        %v309 = vsel %vm267, %v295, %v260
        %v310 = vsel %vm267, %v297, %v261
        %v311 = vsel %vm267, %v299, %v262
        %v312 = vsel %vm267, %v301, %v263
        %v313 = vsel %vm267, %v303, %v264
        %v314 = vsel %vm267, %v305, %v265
        %v315 = vsel %vm267, %v307, %v266
        %v316 = vsel %vm167, 1, 0
        %vm317 = vcmp.eq.s32.totalorder %v316, 1
        %326 = vrot.lane.b32.xlu0 %v308, 126
        %v327 = vpop.permute.xlu0 %326
        %328 = vrot.lane.b32.xlu0 %v309, 126
        %v329 = vpop.permute.xlu0 %328
        %330 = vrot.lane.b32.xlu0 %v310, 126
        %v331 = vpop.permute.xlu0 %330
        %332 = vrot.lane.b32.xlu0 %v311, 126
        %v333 = vpop.permute.xlu0 %332
        %334 = vrot.lane.b32.xlu0 %v312, 126
        %v335 = vpop.permute.xlu0 %334
        %336 = vrot.lane.b32.xlu0 %v313, 126
        %v337 = vpop.permute.xlu0 %336
        %338 = vrot.lane.b32.xlu0 %v314, 126
        %v339 = vpop.permute.xlu0 %338
        %340 = vrot.lane.b32.xlu0 %v315, 126
        %v341 = vpop.permute.xlu0 %340
        %350 = vrot.lane.b32.xlu0 %v308, 98
        %v351 = vpop.permute.xlu0 %350
        %352 = vrot.lane.b32.xlu0 %v309, 98
        %v353 = vpop.permute.xlu0 %352
        %354 = vrot.lane.b32.xlu0 %v310, 98
        %v355 = vpop.permute.xlu0 %354
        %356 = vrot.lane.b32.xlu0 %v311, 98
        %v357 = vpop.permute.xlu0 %356
        %358 = vrot.lane.b32.xlu0 %v312, 98
        %v359 = vpop.permute.xlu0 %358
        %360 = vrot.lane.b32.xlu0 %v313, 98
        %v361 = vpop.permute.xlu0 %360
        %362 = vrot.lane.b32.xlu0 %v314, 98
        %v363 = vpop.permute.xlu0 %362
        %364 = vrot.lane.b32.xlu0 %v315, 98
        %v365 = vpop.permute.xlu0 %364
        %v374 = vsel %vm317, %v327, %v351
        %v375 = vsel %vm317, %v329, %v353
        %v376 = vsel %vm317, %v331, %v355
        %v377 = vsel %vm317, %v333, %v357
        %v378 = vsel %vm317, %v335, %v359
        %v379 = vsel %vm317, %v337, %v361
        %v380 = vsel %vm317, %v339, %v363
        %v381 = vsel %vm317, %v341, %v365
        %v382 = vsel %vm168, 1, 0
        %vm383 = vcmp.eq.s32.totalorder %v382, 1
        %v384 = vsel %vm383, %v374, %v327
        %v385 = vsel %vm383, %v375, %v329
        %v386 = vsel %vm383, %v376, %v331
        %v387 = vsel %vm383, %v377, %v333
        %v388 = vsel %vm383, %v378, %v335
        %v389 = vsel %vm383, %v379, %v337
        %v390 = vsel %vm383, %v380, %v339
        %v391 = vsel %vm383, %v381, %v341
        %v392 = vadd.f32 %v374, %v384
        %v393 = vadd.f32 %v375, %v385
        %v394 = vadd.f32 %v376, %v386
        %v395 = vadd.f32 %v377, %v387
        %v396 = vadd.f32 %v378, %v388
        %v397 = vadd.f32 %v379, %v389
        %v398 = vadd.f32 %v380, %v390
        %v399 = vadd.f32 %v381, %v391
        %v400 = vmul.f32 %v392, 0.31916776
        %v401 = vmul.f32 %v393, 0.31916776
        %v402 = vmul.f32 %v394, 0.31916776
        %v403 = vmul.f32 %v395, 0.31916776
        %v404 = vmul.f32 %v396, 0.31916776
        %v405 = vmul.f32 %v397, 0.31916776
        %v406 = vmul.f32 %v398, 0.31916776
        %v407 = vmul.f32 %v399, 0.31916776
        %v408 = vmul.f32 %v259, 0.36166447
        %v409 = vmul.f32 %v260, 0.36166447
        %v410 = vmul.f32 %v261, 0.36166447
        %v411 = vmul.f32 %v262, 0.36166447
        %v412 = vmul.f32 %v263, 0.36166447
        %v413 = vmul.f32 %v264, 0.36166447
        %v414 = vmul.f32 %v265, 0.36166447
        %v415 = vmul.f32 %v266, 0.36166447
        %v416 = vadd.f32 %v400, %v408
        %v417 = vadd.f32 %v401, %v409
        %v418 = vadd.f32 %v402, %v410
        %v419 = vadd.f32 %v403, %v411
        %v420 = vadd.f32 %v404, %v412
        %v421 = vadd.f32 %v405, %v413
        %v422 = vadd.f32 %v406, %v414
        %v423 = vadd.f32 %v407, %v415
        %vm424 = vcmask 261120
        %425 = vst.msk [vmem:[%s153] sm:$0xff] %vm424, %v416
        %426 = vst.msk [vmem:[%s153 + $0x8] sm:$0xff] %vm424, %v417
        %427 = vst.msk [vmem:[%s153 + $0x10] sm:$0xff] %vm424, %v418
        %428 = vst.msk [vmem:[%s153 + $0x18] sm:$0xff] %vm424, %v419
        %429 = vst.msk [vmem:[%s153 + $0x20] sm:$0xff] %vm424, %v420
        %430 = vst.msk [vmem:[%s153 + $0x28] sm:$0xff] %vm424, %v421
        %431 = vst.msk [vmem:[%s153 + $0x30] sm:$0xff] %vm424, %v422
        %432 = vst.msk [vmem:[%s153 + $0x38] sm:$0xff] %vm424, %v423
        %s433 = sand.u32 %s68, 1
        %s434 = scalar_lea.sflag [#allocation4], %s433
        %s435 = sand.u32 %s68, 1
        %s436 = smul.addr %s435, 64
        %s437 = scalar_lea.vmem [#allocation5], %s436
        // Predicated region
        $region29: #{tpu_custom_call.1} parent=23 // pred_check
          %p438 = pneg %p78
        $region30: #{tpu_custom_call.1} parent=23 // pred_check_branch
          %440 = sbr.rel (%p438) target = $region32
        $region31: #{tpu_custom_call.1} parent=23 // pred_region
          %s441 = smul.u32 4, %s22
          %s442 = smul.u32 2, %s23
          %s444 = ssub.s32 1024, 1024
          %445 = vsyncadd %s434, %s444
          %s446 = smul.addr %s441, 2
          %s447 = sadd.s32 %s442, %s446
          %s448 = smul.addr %s447, 128
          %s449 = scalar_lea.hbm %s1, %s448
          %s450 = sshll.u32 %s437, 4
          %s451 = int_to_ptr.vmem [resolvable:$true] %s450
          %456 = dma.vmem_to_hbm [thread:$0]  %s451, 1024, %s449, %s434, 128, 128, 8
        $region32: #{tpu_custom_call.1} parent=23 // pred_fallthru
          _
      $region24: #{tpu_custom_call.1} parent=5 // pred_fallthru
        _
      %p457 = scmp.le.s32.totalorder 2, %s13
      // Predicated region
      $region33: #{tpu_custom_call.1} parent=5 // pred_check
        %p458 = pneg %p457
      $region34: #{tpu_custom_call.1} parent=5 // pred_check_branch
        %460 = sbr.rel (%p458) target = $region36
      $region35: #{tpu_custom_call.1} parent=5 // pred_region
        %s461 = ssub.s32 %s13, 2
        // Predicated region
        $region37: #{tpu_custom_call.1} parent=35 // pred_check
          %p462 = pneg %p84
        $region38: #{tpu_custom_call.1} parent=35 // pred_check_branch
          %464 = sbr.rel (%p462) target = $region40
        $region39: #{tpu_custom_call.1} parent=35 // pred_region
          %s465 = sand.u32 %s69, 1
          %s466 = scalar_lea.sflag [#allocation4], %s465
          %s467 = sand.u32 %s69, 1
          %s468 = smul.addr %s467, 64
          %s469 = scalar_lea.vmem [#allocation5], %s468
          %470 = dma.done %s466, 1024
        $region40: #{tpu_custom_call.1} parent=35 // pred_fallthru
          _
      $region36: #{tpu_custom_call.1} parent=5 // pred_fallthru
        _
    $region6: #{tpu_custom_call.1} parent=1 // loop_footer
      %s17 = sadd.s32 1, %s13
    $region7: #{tpu_custom_call.1} parent=1 // loop_footer_branch
      %12 = sbr.rel target = $region3
    $region8: #{tpu_custom_call.1} parent=1 // loop_exit
      _
    %471 = vsyncpa [#allocation3], 1
    %s472 = scalar_lea.sflag [#allocation3], 1
    %473 = vsyncpa %s472, 1
    %474 = vsyncpa [#allocation4], 1
    %s475 = scalar_lea.sflag [#allocation4], 1
    %476 = vsyncpa %s475, 1

</llo_original>
